<compile_context>
chip_gen: v7x
topology: tpu7x:2x2x1
jax: 0.10.0
libtpu: 0.0.40
codegen_flags: <defaults>
</compile_context>

<pallas_src>
import functools
import math

import jax
import jax.numpy as jnp
from jax import lax
from jax.experimental import pallas as pl
from jax.experimental.pallas import tpu as pltpu

_MIB = 1024 * 1024
_LIVE_F32_BYTES = 64 * 1024      # target live f32 working set per strip (~16 vregs/temp)


# ---------------------------------------------------------------------------
# Sizing helpers
# ---------------------------------------------------------------------------
def _round_down(x, m):
    return max(m, (x // m) * m)


def _round_up(x, m):
    return ((x + m - 1) // m) * m


def _sublane_align(dtype):
    # 8 rows per sublane tile for 32-bit dtypes, 16 for bf16, 32 for int8/fp8.
    return 8 * max(1, 4 // jnp.dtype(dtype).itemsize)


def _tpu_config():
    """(num_tensorcores, per-call tile budget, scoped-VMEM limit)."""
    ncores = 1
    cap = 64 * _MIB
    try:
        info = pltpu.get_tpu_info()
        cap = int(getattr(info, "vmem_capacity_bytes", cap) or cap)
        for name in ("num_tensorcores", "tensorcores_per_chip", "num_cores", "core_count"):
            v = getattr(info, name, None)
            if v:
                ncores = max(ncores, int(v))
                break
    except Exception:
        pass
    try:
        kind = jax.devices()[0].device_kind.lower()
        if any(t in kind for t in ("v7", "7x", "v4", "v5p")):
            ncores = max(ncores, 2)
    except Exception:
        pass
    # Size tiles against a per-TensorCore share in case the reported capacity
    # is per-chip on a multi-TC part (v7x: 64 MiB per core). ~4 MiB tiles are
    # already at the HBM roofline, so capping is safe on every generation.
    per_core = cap // ncores if ncores > 1 else cap
    tile_budget = max(2 * _MIB, min(per_core // 4, 16 * _MIB))
    vmem_limit = int(min(48 * _MIB, max(per_core // 2, 32 * _MIB)))
    return ncores, tile_budget, vmem_limit


def _pick_block(dim, unit_bytes, tile_budget, align, ncores):
    """Largest block along `dim` (a multiple of `align`, or the full extent)
    whose 4 live tiles (2x double-buffered input + output) fit `tile_budget`,
    keeping >= 2*ncores grid steps when splitting is free and a step count
    divisible by ncores (v7x 2-TC balance) when possible."""
    if dim <= align:
        return dim
    min_steps = max(1, 2 * ncores)
    max_block = max(align, _round_down(tile_budget // (4 * max(1, unit_bytes)), align))
    step_block = max(align, _round_up(pl.cdiv(dim, min_steps), align))
    block = min(max_block, step_block)
    if block >= dim:
        return dim
    if ncores > 1:
        steps = pl.cdiv(dim, block)
        if steps % ncores:
            cand = max(align, _round_up(pl.cdiv(dim, _round_up(steps, ncores)), align))
            if cand <= block and pl.cdiv(dim, cand) % ncores == 0:
                block = cand
    return block


def _fit_sub(block, unit_elems, align):
    """Strip size (<= block, divides block, multiple of `align` unless it is
    the whole block) bounding live f32 temporaries at ~_LIVE_F32_BYTES."""
    cap = max(align, _round_down(_LIVE_F32_BYTES // (max(1, unit_elems) * 4), align))
    sub = min(block, cap)
    if block % sub:
        block = max(sub, (block // sub) * sub)
    return sub, block


# ---------------------------------------------------------------------------
# Kernels
# ---------------------------------------------------------------------------
def _ln_cfirst_kernel(x_ref, w_ref, b_ref, o_ref, *, eps, sub_hw, c_chunk):
    """channels_first: block (bn, C, hw_block); normalize over the sublane C
    axis, spatial rides the 128-lane axis (NCHW read directly, lane-dense
    stores, no HBM transpose).

    If C fits one <=64 KiB chunk the classic centered two-pass form is used;
    otherwise the reduction is streamed over C chunks (3 passes over the
    VMEM-resident tile) so live f32 temporaries stay ~c_chunk*sub_hw and
    nothing spills the vreg file."""
    bn, c, hwb = x_ref.shape
    n_hw = hwb // sub_hw
    c_starts = tuple(range(0, c, c_chunk))
    inv_c = 1.0 / float(c)

    def _strip(bi, l0):
        if len(c_starts) == 1:
            x = x_ref[bi, :, pl.ds(l0, sub_hw)].astype(jnp.float32)      # (C, sub)
            mean = jnp.mean(x, axis=0, keepdims=True)                     # (1, sub)
            xc = x - mean
            var = jnp.mean(xc * xc, axis=0, keepdims=True)
            r = lax.rsqrt(var + eps)
            w = w_ref[...].astype(jnp.float32)                            # (C, 1)
            b = b_ref[...].astype(jnp.float32)
            o_ref[bi, :, pl.ds(l0, sub_hw)] = ((xc * r) * w + b).astype(o_ref.dtype)
        else:
            # Streamed three-pass reduction over C chunks (no vreg spills).
            acc = jnp.zeros((1, sub_hw), jnp.float32)
            for c0 in c_starts:
                cs = min(c_chunk, c - c0)
                xk = x_ref[bi, pl.ds(c0, cs), pl.ds(l0, sub_hw)].astype(jnp.float32)
                acc = acc + jnp.sum(xk, axis=0, keepdims=True)
            mean = acc * inv_c
            acc = jnp.zeros((1, sub_hw), jnp.float32)
            for c0 in c_starts:
                cs = min(c_chunk, c - c0)
                xk = x_ref[bi, pl.ds(c0, cs), pl.ds(l0, sub_hw)].astype(jnp.float32) - mean
                acc = acc + jnp.sum(xk * xk, axis=0, keepdims=True)
            r = lax.rsqrt(acc * inv_c + eps)
            for c0 in c_starts:
                cs = min(c_chunk, c - c0)
                xk = x_ref[bi, pl.ds(c0, cs), pl.ds(l0, sub_hw)].astype(jnp.float32) - mean
                wk = w_ref[pl.ds(c0, cs), :].astype(jnp.float32)
                bk = b_ref[pl.ds(c0, cs), :].astype(jnp.float32)
                o_ref[bi, pl.ds(c0, cs), pl.ds(l0, sub_hw)] = (
                    (xk * r) * wk + bk).astype(o_ref.dtype)

    total = bn * n_hw
    if total == 1:
        _strip(0, 0)
    else:
        def _body(i, carry):
            bi = i // n_hw
            j = i - bi * n_hw
            _strip(bi, pl.multiple_of(j * sub_hw, sub_hw))
            return carry
        lax.fori_loop(0, total, _body, 0, unroll=(total <= 8))


def _ln_rows_kernel(x_ref, w_ref, b_ref, o_ref, *, eps, sub):
    """channels_last, generic C: block (block_rows, C); normalize over lanes."""
    w = w_ref[...].astype(jnp.float32)            # (1, C)  (cast hoisted)
    b = b_ref[...].astype(jnp.float32)
    n_sub = x_ref.shape[0] // sub

    def _process(r0):
        x = x_ref[pl.ds(r0, sub), :].astype(jnp.float32)        # (sub, C)
        mean = jnp.mean(x, axis=-1, keepdims=True)
        xc = x - mean
        var = jnp.mean(xc * xc, axis=-1, keepdims=True)
        y = (xc * lax.rsqrt(var + eps)) * w + b
        o_ref[pl.ds(r0, sub), :] = y.astype(o_ref.dtype)

    if n_sub == 1:
        _process(0)
    else:
        def _body(i, carry):
            _process(pl.multiple_of(i * sub, sub))
            return carry
        lax.fori_loop(0, n_sub, _body, 0, unroll=(n_sub <= 8))


def _ln_packed_kernel(x_ref, w_ref, b_ref, o_ref, *, eps, c, sub, use_mxu):
    """channels_last with small power-of-two C (<128): the contiguous (rows, C)
    slab is viewed as (rows*C/128, 128) so every load/store is a full,
    unmasked 128-lane vreg. Each lane needs the sum over its aligned group of
    C lanes:
      * C >= 32: one block-diagonal-ones matmul per reduction on the otherwise
        idle MXU (exact via a bf16x3 operand split) -- keeps the XLU free.
      * C < 32 : in-lane hypercube (butterfly) segmented sum via pltpu.roll.
    """
    lanes = x_ref.shape[-1]                       # 128
    w = w_ref[...].astype(jnp.float32)            # (1, 128) = tile(weight, 128//C)
    b = b_ref[...].astype(jnp.float32)
    n_sub = x_ref.shape[0] // sub
    inv_c = 1.0 / float(c)

    if use_mxu:
        gi = lax.broadcasted_iota(jnp.int32, (lanes, lanes), 0) // c
        gj = lax.broadcasted_iota(jnp.int32, (lanes, lanes), 1) // c
        seg = (gi == gj).astype(jnp.bfloat16)     # block-diagonal ones, constant

        def _seg_sum(v):                          # v: (sub, 128) f32, exact sum
            hi = v.astype(jnp.bfloat16)
            rem = v - hi.astype(jnp.float32)
            mid = rem.astype(jnp.bfloat16)
            lo = (rem - mid.astype(jnp.float32)).astype(jnp.bfloat16)
            out = jnp.dot(hi, seg, preferred_element_type=jnp.float32)
            out = out + jnp.dot(mid, seg, preferred_element_type=jnp.float32)
            out = out + jnp.dot(lo, seg, preferred_element_type=jnp.float32)
            return out
    else:
        lane = lax.broadcasted_iota(jnp.int32, (sub, lanes), 1)
        shifts = [1 << k for k in range(max(0, int(c).bit_length() - 1))]
        masks = [(lane & d) == 0 for d in shifts]          # hoisted

        def _seg_sum(v):
            for d, m in zip(shifts, masks):
                up = pltpu.roll(v, lanes - d, axis=1)       # value at lane l + d
                dn = pltpu.roll(v, d, axis=1)               # value at lane l - d
                v = v + jnp.where(m, up, dn)
            return v

    def _process(r0):
        x = x_ref[pl.ds(r0, sub), :].astype(jnp.float32)
        mean = _seg_sum(x) * inv_c
        xc = x - mean
        var = _seg_sum(xc * xc) * inv_c
        y = (xc * lax.rsqrt(var + eps)) * w + b
        o_ref[pl.ds(r0, sub), :] = y.astype(o_ref.dtype)

    if n_sub == 1:
        _process(0)
    else:
        def _body(i, carry):
            _process(pl.multiple_of(i * sub, sub))
            return carry
        lax.fori_loop(0, n_sub, _body, 0, unroll=(n_sub <= 8))


# ---------------------------------------------------------------------------
# Wrappers
# ---------------------------------------------------------------------------
def _layernorm_channels_last(x, weight, bias, eps, ncores, tile_budget, vmem_limit):
    c = x.shape[-1]
    rows = int(math.prod(x.shape[:-1])) if x.ndim > 1 else 1
    total = rows * c
    itemsize = jnp.dtype(x.dtype).itemsize
    align = _sublane_align(x.dtype)
    w32 = weight.astype(jnp.float32)
    b32 = bias.astype(jnp.float32)
    cparams = pltpu.CompilerParams(dimension_semantics=("parallel",),
                                   vmem_limit_bytes=vmem_limit)

    # Lane-packed fast path: small power-of-two C -> view slab as (G, 128).
    if 0 < c < 128 and 128 % c == 0 and total >= 128 and total % 128 == 0:
        g = total // 128
        xg = x.reshape(g, 128)                       # contiguous -> free reshape
        rep = 128 // c
        wt = jnp.tile(w32.reshape(1, c), (1, rep))
        bt = jnp.tile(b32.reshape(1, c), (1, rep))
        block_g = _pick_block(g, 128 * itemsize, tile_budget, align, ncores)
        sub, block_g = _fit_sub(block_g, 128, align)
        out = pl.pallas_call(
            functools.partial(_ln_packed_kernel, eps=float(eps), c=int(c),
                              sub=int(sub), use_mxu=bool(c >= 32)),
            out_shape=jax.ShapeDtypeStruct((g, 128), x.dtype),
            grid_spec=pltpu.PrefetchScalarGridSpec(
                num_scalar_prefetch=0,
                grid=(pl.cdiv(g, block_g),),
                in_specs=[
                    pl.BlockSpec((block_g, 128), lambda i: (i, 0)),
                    pl.BlockSpec((1, 128), lambda i: (0, 0)),
                    pl.BlockSpec((1, 128), lambda i: (0, 0)),
                ],
                out_specs=pl.BlockSpec((block_g, 128), lambda i: (i, 0)),
            ),
            compiler_params=cparams,
        )(xg, wt, bt)
        return out.reshape(x.shape)

    # Generic path: block (block_rows, C); C is the full lane extent.
    x2d = x.reshape(rows, c)
    block_rows = _pick_block(rows, c * itemsize, tile_budget, align, ncores)
    sub, block_rows = _fit_sub(block_rows, c, align)
    out = pl.pallas_call(
        functools.partial(_ln_rows_kernel, eps=float(eps), sub=int(sub)),
        out_shape=jax.ShapeDtypeStruct((rows, c), x.dtype),
        grid_spec=pltpu.PrefetchScalarGridSpec(
            num_scalar_prefetch=0,
            grid=(pl.cdiv(rows, block_rows),),
            in_specs=[
                pl.BlockSpec((block_rows, c), lambda i: (i, 0)),
                pl.BlockSpec((1, c), lambda i: (0, 0)),
                pl.BlockSpec((1, c), lambda i: (0, 0)),
            ],
            out_specs=pl.BlockSpec((block_rows, c), lambda i: (i, 0)),
        ),
        compiler_params=cparams,
    )(x2d, w32.reshape(1, c), b32.reshape(1, c))
    return out.reshape(x.shape)


def _layernorm_channels_first(x, weight, bias, eps, ncores, tile_budget, vmem_limit):
    # Read NCHW directly (no HBM transposes): (N, C, H*W), reduce over C.
    n, c = x.shape[0], x.shape[1]
    hw = int(math.prod(x.shape[2:])) if x.ndim > 2 else 1
    itemsize = jnp.dtype(x.dtype).itemsize
    c_align = _sublane_align(x.dtype)
    x3d = x.reshape(n, c, hw)
    w2 = weight.astype(jnp.float32).reshape(c, 1)
    b2 = bias.astype(jnp.float32).reshape(c, 1)

    hw_single = max(128, _round_down(_LIVE_F32_BYTES // (c_align * 4), 128))

    if hw <= hw_single:
        # Whole spatial extent in one block; fold batch rows into the tile so
        # small late-stage tensors (hw = 49 / 196) amortize the per-step cost.
        bn = _pick_block(n, c * hw * itemsize, tile_budget, 1, ncores)
        sub_hw, hwb = hw, hw
        grid = (pl.cdiv(n, bn),)
        x_spec = pl.BlockSpec((bn, c, hw), lambda i: (i, 0, 0))
        p_spec = pl.BlockSpec((c, 1), lambda i: (0, 0))
        dims = ("parallel",)
    else:
        # Large spatial extent: one batch row per block, 128-aligned hw strips.
        bn = 1
        sub_hw = max(128, min(1024, _round_down(_LIVE_F32_BYTES // (max(1, c) * 4), 128)))
        hw_cores = ncores if n < 2 * ncores else 1
        hwb = _pick_block(hw, c * itemsize, tile_budget, sub_hw, hw_cores)
        if hwb % sub_hw:
            hwb = max(sub_hw, (hwb // sub_hw) * sub_hw)
        grid = (n, pl.cdiv(hw, hwb))
        x_spec = pl.BlockSpec((1, c, hwb), lambda i, j: (i, 0, j))
        p_spec = pl.BlockSpec((c, 1), lambda i, j: (0, 0))
        dims = ("parallel", "parallel")

    c_chunk = max(1, min(c, _round_down(_LIVE_F32_BYTES // (sub_hw * 4), c_align)))
    out = pl.pallas_call(
        functools.partial(_ln_cfirst_kernel, eps=float(eps),
                          sub_hw=int(sub_hw), c_chunk=int(c_chunk)),
        out_shape=jax.ShapeDtypeStruct((n, c, hw), x.dtype),
        grid_spec=pltpu.PrefetchScalarGridSpec(
            num_scalar_prefetch=0, grid=grid,
            in_specs=[x_spec, p_spec, p_spec],
            out_specs=x_spec),
        compiler_params=pltpu.CompilerParams(
            dimension_semantics=dims, vmem_limit_bytes=vmem_limit),
    )(x3d, w2, b2)
    return out.reshape(x.shape)


def layer_norm_pallas(x, weight, bias, eps=1e-6, data_format="channels_last"):
    """Matches convnextv2.LayerNorm.forward semantics."""
    if data_format not in ("channels_last", "channels_first"):
        raise NotImplementedError
    ncores, tile_budget, vmem_limit = _tpu_config()
    if data_format == "channels_last":
        return _layernorm_channels_last(x, weight, bias, eps, ncores, tile_budget, vmem_limit)
    return _layernorm_channels_first(x, weight, bias, eps, ncores, tile_budget, vmem_limit)


# ---------------------------------------------------------------------------
# Pure-JAX reference + self-check
# ---------------------------------------------------------------------------
def _ref_layer_norm(x, weight, bias, eps, data_format):
    if data_format == "channels_last":
        mean = jnp.mean(x, axis=-1, keepdims=True)
        var = jnp.mean((x - mean) ** 2, axis=-1, keepdims=True)
        return (x - mean) / jnp.sqrt(var + eps) * weight + bias
    u = jnp.mean(x, axis=1, keepdims=True)
    s = jnp.mean((x - u) ** 2, axis=1, keepdims=True)
    xn = (x - u) / jnp.sqrt(s + eps)
    w = weight.reshape((1, -1) + (1,) * (x.ndim - 2))
    b = bias.reshape((1, -1) + (1,) * (x.ndim - 2))
    return w * xn + b


if __name__ == "__main__":
    key = jax.random.PRNGKey(0)
    eps = 1e-6
    cases = [
        ("channels_first", (2, 4, 16, 16)),    # tiny C: single chunk, no loop
        ("channels_first", (8, 96, 16, 16)),   # batch fold + streamed C chunks
        ("channels_last", (2, 16, 16, 4)),     # lane-packed, butterfly seg-sum
        ("channels_last", (2, 8, 8, 32)),      # lane-packed, MXU seg-sum
        ("channels_last", (2, 4, 4, 96)),      # generic row path
        ("channels_last", (4, 64, 64, 4)),     # packed path with strip loop
    ]
    for idx, (fmt, shape) in enumerate(cases):
        kx, kw, kb, key = jax.random.split(key, 4)
        c = shape[1] if fmt == "channels_first" else shape[-1]
        weight = 1.0 + 0.1 * jax.random.normal(kw, (c,), jnp.float32)
        bias = 0.1 * jax.random.normal(kb, (c,), jnp.float32)
        x = jax.random.normal(kx, shape, jnp.float32)
        y = jax.block_until_ready(layer_norm_pallas(x, weight, bias, eps, fmt))
        ref = _ref_layer_norm(x, weight, bias, eps, fmt)
        assert y.shape == x.shape and y.dtype == x.dtype
        assert jnp.allclose(y, ref, atol=1e-5, rtol=1e-5), \
            f"mismatch in case {idx}: {fmt} {shape}"
    print("KERNEL_OK")
</pallas_src>

<mosaic_0001>
module attributes {stable_mosaic.version = 11 : i64} {
  func.func @_ln_cfirst_kernel(%arg0: i32, %arg1: memref<1x4x256xf32, #tpu.memory_space<vmem>>, %arg2: memref<4x1xf32, #tpu.memory_space<vmem>>, %arg3: memref<4x1xf32, #tpu.memory_space<vmem>>, %arg4: memref<1x4x256xf32, #tpu.memory_space<vmem>>) attributes {dimension_semantics = [#tpu.dimension_semantics<parallel>], iteration_bounds = array<i64: 2>, scalar_prefetch = 0 : i64, scratch_operands = 0 : i64, tpu.core_type = #tpu.core_type<tc>, window_params = [{transform_indices = @transform_0, window_bounds = array<i64: 1, 4, 256>}, {pipeline_mode = #tpu.pipeline_mode<synchronous>, transform_indices = @transform_1, window_bounds = array<i64: 4, 1>}, {pipeline_mode = #tpu.pipeline_mode<synchronous>, transform_indices = @transform_2, window_bounds = array<i64: 4, 1>}, {transform_indices = @transform_3, window_bounds = array<i64: 1, 4, 256>}]} {
    %c0 = arith.constant 0 : index
    %c0_0 = arith.constant 0 : index
    %c0_1 = arith.constant 0 : index
    %0 = vector.load %arg1[%c0, %c0_0, %c0_1] : memref<1x4x256xf32, #tpu.memory_space<vmem>>, vector<1x4x256xf32>
    %1 = vector.shape_cast %0 : vector<1x4x256xf32> to vector<4x256xf32>
    %cst = arith.constant dense<0.000000e+00> : vector<256xf32>
    %2 = vector.multi_reduction <add>, %1, %cst [0] : vector<4x256xf32> to vector<256xf32>
    %3 = vector.shape_cast %2 : vector<256xf32> to vector<1x256xf32>
    %cst_2 = arith.constant 4.000000e+00 : f32
    %4 = vector.broadcast %cst_2 : f32 to vector<1x256xf32>
    %5 = arith.divf %3, %4 : vector<1x256xf32>
    %6 = vector.broadcast %5 : vector<1x256xf32> to vector<4x256xf32>
    %7 = arith.subf %1, %6 : vector<4x256xf32>
    %8 = arith.mulf %7, %7 : vector<4x256xf32>
    %cst_3 = arith.constant dense<0.000000e+00> : vector<256xf32>
    %9 = vector.multi_reduction <add>, %8, %cst_3 [0] : vector<4x256xf32> to vector<256xf32>
    %10 = vector.shape_cast %9 : vector<256xf32> to vector<1x256xf32>
    %cst_4 = arith.constant 4.000000e+00 : f32
    %11 = vector.broadcast %cst_4 : f32 to vector<1x256xf32>
    %12 = arith.divf %10, %11 : vector<1x256xf32>
    %cst_5 = arith.constant 9.99999997E-7 : f32
    %13 = vector.broadcast %cst_5 : f32 to vector<1x256xf32>
    %14 = arith.addf %12, %13 : vector<1x256xf32>
    %15 = math.rsqrt %14 : vector<1x256xf32>
    %c0_6 = arith.constant 0 : index
    %c0_7 = arith.constant 0 : index
    %16 = vector.load %arg2[%c0_6, %c0_7] : memref<4x1xf32, #tpu.memory_space<vmem>>, vector<4x1xf32>
    %c0_8 = arith.constant 0 : index
    %c0_9 = arith.constant 0 : index
    %17 = vector.load %arg3[%c0_8, %c0_9] : memref<4x1xf32, #tpu.memory_space<vmem>>, vector<4x1xf32>
    %18 = vector.broadcast %15 : vector<1x256xf32> to vector<4x256xf32>
    %19 = arith.mulf %7, %18 : vector<4x256xf32>
    %20 = vector.broadcast %16 : vector<4x1xf32> to vector<4x256xf32>
    %21 = arith.mulf %19, %20 : vector<4x256xf32>
    %22 = vector.broadcast %17 : vector<4x1xf32> to vector<4x256xf32>
    %23 = arith.addf %21, %22 : vector<4x256xf32>
    %c0_10 = arith.constant 0 : index
    %c0_11 = arith.constant 0 : index
    %c0_12 = arith.constant 0 : index
    %24 = vector.load %arg4[%c0_10, %c0_11, %c0_12] : memref<1x4x256xf32, #tpu.memory_space<vmem>>, vector<1x4x256xf32>
    %25 = vector.shape_cast %24 : vector<1x4x256xf32> to vector<4x256xf32>
    %26 = vector.shape_cast %23 : vector<4x256xf32> to vector<1x4x256xf32>
    tpu.vector_store %arg4[%c0_10, %c0_11, %c0_12], %26 {strides = array<i32>} : memref<1x4x256xf32, #tpu.memory_space<vmem>>, vector<1x4x256xf32>,
    return
  }
  func.func @transform_0(%arg0: i32) -> (i32, i32, i32) {
    %c0_i32 = arith.constant 0 : i32
    %c0_i32_0 = arith.constant 0 : i32
    %c0_i32_1 = arith.constant 0 : i32
    return %arg0, %c0_i32, %c0_i32_0 : i32, i32, i32
  }
  func.func @transform_1(%arg0: i32) -> (i32, i32) {
    %c0_i32 = arith.constant 0 : i32
    %c0_i32_0 = arith.constant 0 : i32
    %c0_i32_1 = arith.constant 0 : i32
    return %c0_i32, %c0_i32_0 : i32, i32
  }
  func.func @transform_2(%arg0: i32) -> (i32, i32) {
    %c0_i32 = arith.constant 0 : i32
    %c0_i32_0 = arith.constant 0 : i32
    %c0_i32_1 = arith.constant 0 : i32
    return %c0_i32, %c0_i32_0 : i32, i32
  }
  func.func @transform_3(%arg0: i32) -> (i32, i32, i32) {
    %c0_i32 = arith.constant 0 : i32
    %c0_i32_0 = arith.constant 0 : i32
    %c0_i32_1 = arith.constant 0 : i32
    return %arg0, %c0_i32, %c0_i32_0 : i32, i32, i32
  }
}

</mosaic_0001>

<llo_original>
// kernel: tpu_custom_call.1
$region0: #{tpu_custom_call.1}
  #allocation0 [shape = 'u32[]', space=smem, size = 0x4, offset = 0x4, fixed_abs, tag = 'smem constant byte address 0x4 - core index']
  #allocation1 [shape = 'u32[144,128]{1,0:T(1,128)}', space=vmem, size = 0x12000, scoped, tag = 'internal scratch']
  %s0 = inlined_call_operand.hbm [shape: f32[2,4,256], index: 0, kind: input, shape index: {}]
  %s1 = inlined_call_operand.vmem [shape: f32[4,1], index: 1, kind: input, shape index: {}]
  %s2 = inlined_call_operand.vmem [shape: f32[4,1], index: 2, kind: input, shape index: {}]
  %s3 = inlined_call_operand.hbm [shape: f32[2,4,256], index: 3, kind: output, shape index: {}]
  %s4 = sld [smem:[#allocation0]]
  $region49: #{tpu_custom_call.1} parent=0
    _
  %s6 = ssub.s32 1, %s4
  %s7 = scalar_select 0, %s6, %s4
  $region1: #{tpu_custom_call.1} parent=0
    #allocation2 [shape = 'u8[8192]{0}', space=vmem, size = 0x2000, scoped, tag = 'input window, operand 0']
    #allocation3 [shape = 's32[2]{0}', space=sflag, size = 0x8, scoped, tag = 'scoped memory for tpu_custom_call.1']
    #allocation4 [shape = 's32[2]{0}', space=sflag, size = 0x8, scoped, tag = 'scoped memory for tpu_custom_call.1']
    #allocation5 [shape = 'u8[8192]{0}', space=vmem, size = 0x2000, scoped, tag = 'output window, operand 0']
    %8 = vsyncpa [#allocation3], 0
    %s9 = scalar_lea.sflag [#allocation3], 1
    %10 = vsyncpa %s9, 0
    %11 = vsyncpa [#allocation4], 0
    %s12 = scalar_lea.sflag [#allocation4], 1
    %13 = vsyncpa %s12, 0
    loop: start=0, step=1, limit=4
    $region2: #{tpu_custom_call.1} parent=1 // loop_pre_header
      _
    $region3: #{tpu_custom_call.1} parent=1 // loop_header
      %s15 = sphi 0, %s19
      %p16 = scmp.ge.s32.totalorder %s15, 4
      %s25 = sphi 0, %s27
      %s28 = sphi 0, %s25
      %s29 = sphi 0, %s28
      %s45 = sphi 0, %s29
      %s49 = sphi 0, %s49
      %s51 = sphi 0, %s49
      %s52 = sphi 0, %s51
      %s66 = sphi 0, %s52
      %s70 = sphi 0, %s70
      %s72 = sphi 0, %s70
      %s73 = sphi 0, %s72
      %s87 = sphi 0, %s73
      %s93 = sphi 0, %s95
      %s96 = sphi 0, %s93
      %s97 = sphi 0, %s96
      %s113 = sphi 0, %s97
    $region4: #{tpu_custom_call.1} parent=1 // loop_header_branch
      %18 = sbr.rel (%p16) target = $region8
    $region5: #{tpu_custom_call.1} parent=1 // loop_body
      %s20 = ssub.s32 %s15, 1
      %s21 = ssub.s32 %s15, 2
      %s22 = sadd.s32 %s15, 1
      %s23 = ssub.s32 %s15, %s22
      %p24 = scmp.eq.s32.totalorder %s23, 0
      %s26 = sadd.s32 %s25, 1
      %s27 = scalar_select %p24, %s25, %s26
      %p30 = pneg %p24
      %p31 = scmp.eq.s32.totalorder %s15, 1
      %p32 = por %p30, %p31
      %p33 = scmp.ne.s32.totalorder %s25, %s28
      %p34 = scmp.eq.s32.totalorder %s15, 0
      %p35 = por %p33, %p34
      %p36 = scmp.ne.s32.totalorder %s25, %s28
      %p37 = scmp.eq.s32.totalorder %s20, 1
      %p38 = por %p36, %p37
      %p39 = scmp.ne.s32.totalorder %s28, %s29
      %p40 = scmp.eq.s32.totalorder %s20, 0
      %p41 = por %p39, %p40
      %p42 = scmp.ne.s32.totalorder %s28, %s29
      %p43 = scmp.eq.s32.totalorder %s21, 1
      %p44 = por %p42, %p43
      %p46 = scmp.ne.s32.totalorder %s29, %s45
      %p47 = scmp.eq.s32.totalorder %s21, 0
      %p48 = por %p46, %p47
      %s50 = sadd.s32 %s49, 1
      %p53 = scmp.eq.s32.totalorder %s15, 1
      %p54 = scmp.ne.s32.totalorder %s49, %s51
      %p55 = scmp.eq.s32.totalorder %s15, 0
      %p56 = por %p54, %p55
      %p57 = scmp.ne.s32.totalorder %s49, %s51
      %p58 = scmp.eq.s32.totalorder %s20, 1
      %p59 = por %p57, %p58
      %p60 = scmp.ne.s32.totalorder %s51, %s52
      %p61 = scmp.eq.s32.totalorder %s20, 0
      %p62 = por %p60, %p61
      %p63 = scmp.ne.s32.totalorder %s51, %s52
      %p64 = scmp.eq.s32.totalorder %s21, 1
      %p65 = por %p63, %p64
      %p67 = scmp.ne.s32.totalorder %s52, %s66
      %p68 = scmp.eq.s32.totalorder %s21, 0
      %p69 = por %p67, %p68
      %s71 = sadd.s32 %s70, 1
      %p74 = scmp.eq.s32.totalorder %s15, 1
      %p75 = scmp.ne.s32.totalorder %s70, %s72
      %p76 = scmp.eq.s32.totalorder %s15, 0
      %p77 = por %p75, %p76
      %p78 = scmp.ne.s32.totalorder %s70, %s72
      %p79 = scmp.eq.s32.totalorder %s20, 1
      %p80 = por %p78, %p79
      %p81 = scmp.ne.s32.totalorder %s72, %s73
      %p82 = scmp.eq.s32.totalorder %s20, 0
      %p83 = por %p81, %p82
      %p84 = scmp.ne.s32.totalorder %s72, %s73
      %p85 = scmp.eq.s32.totalorder %s21, 1
      %p86 = por %p84, %p85
      %p88 = scmp.ne.s32.totalorder %s73, %s87
      %p89 = scmp.eq.s32.totalorder %s21, 0
      %p90 = por %p88, %p89
      %s91 = ssub.s32 %s15, %s22
      %p92 = scmp.eq.s32.totalorder %s91, 0
      %s94 = sadd.s32 %s93, 1
      %s95 = scalar_select %p92, %s93, %s94
      %p98 = pneg %p92
      %p99 = scmp.eq.s32.totalorder %s15, 1
      %p100 = por %p98, %p99
      %p101 = scmp.ne.s32.totalorder %s93, %s96
      %p102 = scmp.eq.s32.totalorder %s15, 0
      %p103 = por %p101, %p102
      %p104 = scmp.ne.s32.totalorder %s93, %s96
      %p105 = scmp.eq.s32.totalorder %s20, 1
      %p106 = por %p104, %p105
      %p107 = scmp.ne.s32.totalorder %s96, %s97
      %p108 = scmp.eq.s32.totalorder %s20, 0
      %p109 = por %p107, %p108
      %p110 = scmp.ne.s32.totalorder %s96, %s97
      %p111 = scmp.eq.s32.totalorder %s21, 1
      %p112 = por %p110, %p111
      %p114 = scmp.ne.s32.totalorder %s97, %s113
      %p115 = scmp.eq.s32.totalorder %s21, 0
      %p116 = por %p114, %p115
      %p117 = scmp.le.s32.totalorder 1, %s15
      %p118 = scmp.lt.s32.totalorder %s15, 3
      %p119 = pnand %p117, %p118
      %p120 = pneg %p119
      // Predicated region
      $region9: #{tpu_custom_call.1} parent=5 // pred_check
        _
      $region10: #{tpu_custom_call.1} parent=5 // pred_check_branch
        %122 = sbr.rel (%p119) target = $region12
      $region11: #{tpu_custom_call.1} parent=5 // pred_region
        %s123 = ssub.s32 %s15, 1
        // Predicated region
        $region13: #{tpu_custom_call.1} parent=11 // pred_check
          %p124 = pneg %p62
        $region14: #{tpu_custom_call.1} parent=11 // pred_check_branch
          %126 = sbr.rel (%p124) target = $region16
        $region15: #{tpu_custom_call.1} parent=11 // pred_region
          _
        $region16: #{tpu_custom_call.1} parent=11 // pred_fallthru
          _
        // Predicated region
        $region17: #{tpu_custom_call.1} parent=11 // pred_check
          %p127 = pneg %p83
        $region18: #{tpu_custom_call.1} parent=11 // pred_check_branch
          %129 = sbr.rel (%p127) target = $region20
        $region19: #{tpu_custom_call.1} parent=11 // pred_region
          _
        $region20: #{tpu_custom_call.1} parent=11 // pred_fallthru
          _
      $region12: #{tpu_custom_call.1} parent=5 // pred_fallthru
        _
      %p130 = scmp.lt.s32.totalorder %s15, 2
      // Predicated region
      $region21: #{tpu_custom_call.1} parent=5 // pred_check
        %p131 = pneg %p130
      $region22: #{tpu_custom_call.1} parent=5 // pred_check_branch
        %133 = sbr.rel (%p131) target = $region24
      $region23: #{tpu_custom_call.1} parent=5 // pred_region
        // Predicated region
        $region25: #{tpu_custom_call.1} parent=23 // pred_check
          %p134 = pneg %p35
        $region26: #{tpu_custom_call.1} parent=23 // pred_check_branch
          %136 = sbr.rel (%p134) target = $region28
        $region27: #{tpu_custom_call.1} parent=23 // pred_region
          %s137 = sand.u32 %s25, 1
          %s138 = scalar_lea.sflag [#allocation3], %s137
          %s139 = sand.u32 %s25, 1
          %s140 = smul.addr %s139, 8
          %s141 = scalar_lea.vmem [#allocation2], %s140
          %s143 = ssub.s32 128, 128
          %144 = vsyncadd %s138, %s143
          %s145 = smul.addr %s15, 2
          %s146 = smul.addr %s145, 64
          %s147 = scalar_lea.hbm %s0, %s146
          %s149 = sshll.u32 %s141, 4
          %s150 = int_to_ptr.vmem [resolvable:$true] %s149
          %152 = dma.hbm_to_vmem [thread:$0]  %s147, 128, %s150, %s138
        $region28: #{tpu_custom_call.1} parent=23 // pred_fallthru
          _
      $region24: #{tpu_custom_call.1} parent=5 // pred_fallthru
        _
      %p153 = scmp.le.s32.totalorder 1, %s15
      %p154 = scmp.lt.s32.totalorder %s15, 3
      %p155 = pnand %p153, %p154
      %p156 = pneg %p155
      // Predicated region
      $region29: #{tpu_custom_call.1} parent=5 // pred_check
        _
      $region30: #{tpu_custom_call.1} parent=5 // pred_check_branch
        %158 = sbr.rel (%p155) target = $region32
      $region31: #{tpu_custom_call.1} parent=5 // pred_region
        %s159 = ssub.s32 %s15, 1
        %s160 = sand.u32 %s28, 1
        %s161 = scalar_lea.sflag [#allocation3], %s160
        %s162 = sand.u32 %s28, 1
        %s163 = smul.addr %s162, 8
        %s164 = scalar_lea.vmem [#allocation2], %s163
        // Predicated region
        $region33: #{tpu_custom_call.1} parent=31 // pred_check
          %p165 = pneg %p41
        $region34: #{tpu_custom_call.1} parent=31 // pred_check_branch
          %167 = sbr.rel (%p165) target = $region36
        $region35: #{tpu_custom_call.1} parent=31 // pred_region
          %168 = dma.done %s161, 128
        $region36: #{tpu_custom_call.1} parent=31 // pred_fallthru
          _
        %s169 = sand.u32 %s28, 1
        %s170 = scalar_lea.sflag [#allocation3], %s169
        %s171 = sand.u32 %s28, 1
        %s172 = smul.addr %s171, 8
        %s173 = scalar_lea.vmem [#allocation2], %s172
        %p174 = pneg %p41
        %p175 = pneg %p38
        %p176 = pneg %p62
        %p177 = pneg %p59
        %p178 = pneg %p83
        %p179 = pneg %p80
        %p180 = pneg %p109
        %p181 = pneg %p106
        %s182 = sand.u32 %s96, 1
        %s183 = scalar_lea.sflag [#allocation4], %s182
        %s184 = sand.u32 %s96, 1
        %s185 = smul.addr %s184, 8
        %s186 = scalar_lea.vmem [#allocation5], %s185
        %v187 = vld [vmem:[%s164] sm:$0xff]
        %v189 = vcombine.high %v187, %v187
        %vm191 = vcmask 1043456
        %v192 = vsel %vm191, %v187, 0.0
        %v193 = vrot.slane %v192, 4
        %v194 = vadd.f32 %v192, %v193
        %v195 = vrot.slane %v194, 2
        %v196 = vadd.f32 %v194, %v195
        %v197 = vrot.slane %v196, 1
        %v198 = vadd.f32 %v196, %v197
        %v199 = vsel %vm191, %v189, 0.0
        %v200 = vrot.slane %v199, 4
        %v201 = vadd.f32 %v199, %v200
        %v202 = vrot.slane %v201, 2
        %v203 = vadd.f32 %v201, %v202
        %v204 = vrot.slane %v203, 1
        %v205 = vadd.f32 %v203, %v204
        %v206 = vrcp.pop 4.0
        %v207 = vmul.f32 %v198, %v206
        %v208 = vmul.f32 %v205, %v206
        %v211 = vcombine.low %v207, %v208
        %v213 = vsub.f32 %v187, %v211
        %v214 = vmul.f32 %v213, %v213
        %v216 = vcombine.high %v214, %v214
        %v218 = vsel %vm191, %v214, 0.0
        %v219 = vrot.slane %v218, 4
        %v220 = vadd.f32 %v218, %v219
        %v221 = vrot.slane %v220, 2
        %v222 = vadd.f32 %v220, %v221
        %v223 = vrot.slane %v222, 1
        %v224 = vadd.f32 %v222, %v223
        %v225 = vsel %vm191, %v216, 0.0
        %v226 = vrot.slane %v225, 4
        %v227 = vadd.f32 %v225, %v226
        %v228 = vrot.slane %v227, 2
        %v229 = vadd.f32 %v227, %v228
        %v230 = vrot.slane %v229, 1
        %v231 = vadd.f32 %v229, %v230
        %v232 = vmul.f32 %v224, %v206
        %v233 = vmul.f32 %v231, %v206
        %v234 = vadd.f32 %v232, 1e-06
        %v235 = vadd.f32 %v233, 1e-06
        %v236 = vrsqrt.pop %v234
        %v237 = vrsqrt.pop %v235
        %v238 = vld [vmem:[%s1] sm:$0xf]
        %v239 = vld [vmem:[%s2] sm:$0xf]
        %v242 = vcombine.low %v236, %v237
        %v244 = vmul.f32 %v213, %v242
        %246 = vset.pattern.permute.xlu0 0
        %247 = vperm.xlu0 %246, %v238
        %v248 = vpop.permute.xlu0 %247
        %v250 = vunpack.c.l.s4 839922192
        %v251 = vunpack.c.0.s8 %v250
        %v252 = vlaneseq
        %v253 = vshrl.u32 %v252, 7
        %v254 = vsub.s32 %v251, %v253
        %v255 = vrot.slane %v248, %v254
        %v257 = vmul.f32 %v244, %v255
        %259 = vset.pattern.permute.xlu0 0
        %260 = vperm.xlu0 %259, %v239
        %v261 = vpop.permute.xlu0 %260
        %v263 = vunpack.c.l.s4 839922192
        %v264 = vunpack.c.0.s8 %v263
        %v265 = vlaneseq
        %v266 = vshrl.u32 %v265, 7
        %v267 = vsub.s32 %v264, %v266
        %v268 = vrot.slane %v261, %v267
        %v270 = vadd.f32 %v257, %v268
        %271 = vst [vmem:[%s186] sm:$0xff] %v270
        %s272 = sand.u32 %s96, 1
        %s273 = scalar_lea.sflag [#allocation4], %s272
        %s274 = sand.u32 %s96, 1
        %s275 = smul.addr %s274, 8
        %s276 = scalar_lea.vmem [#allocation5], %s275
        // Predicated region
        $region37: #{tpu_custom_call.1} parent=31 // pred_check
          %p277 = pneg %p106
        $region38: #{tpu_custom_call.1} parent=31 // pred_check_branch
          %279 = sbr.rel (%p277) target = $region40
        $region39: #{tpu_custom_call.1} parent=31 // pred_region
          %s281 = ssub.s32 128, 128
          %282 = vsyncadd %s273, %s281
          %s283 = smul.addr %s20, 2
          %s284 = smul.addr %s283, 64
          %s285 = scalar_lea.hbm %s3, %s284
          %s287 = sshll.u32 %s276, 4
          %s288 = int_to_ptr.vmem [resolvable:$true] %s287
          %290 = dma.vmem_to_hbm [thread:$0]  %s288, 128, %s285, %s273
        $region40: #{tpu_custom_call.1} parent=31 // pred_fallthru
          _
      $region32: #{tpu_custom_call.1} parent=5 // pred_fallthru
        _
      %p291 = scmp.le.s32.totalorder 2, %s15
      // Predicated region
      $region41: #{tpu_custom_call.1} parent=5 // pred_check
        %p292 = pneg %p291
      $region42: #{tpu_custom_call.1} parent=5 // pred_check_branch
        %294 = sbr.rel (%p292) target = $region44
      $region43: #{tpu_custom_call.1} parent=5 // pred_region
        %s295 = ssub.s32 %s15, 2
        // Predicated region
        $region45: #{tpu_custom_call.1} parent=43 // pred_check
          %p296 = pneg %p112
        $region46: #{tpu_custom_call.1} parent=43 // pred_check_branch
          %298 = sbr.rel (%p296) target = $region48
        $region47: #{tpu_custom_call.1} parent=43 // pred_region
          %s299 = sand.u32 %s97, 1
          %s300 = scalar_lea.sflag [#allocation4], %s299
          %s301 = sand.u32 %s97, 1
          %s302 = smul.addr %s301, 8
          %s303 = scalar_lea.vmem [#allocation5], %s302
          %304 = dma.done %s300, 128
        $region48: #{tpu_custom_call.1} parent=43 // pred_fallthru
          _
      $region44: #{tpu_custom_call.1} parent=5 // pred_fallthru
        _
    $region6: #{tpu_custom_call.1} parent=1 // loop_footer
      %s19 = sadd.s32 1, %s15
    $region7: #{tpu_custom_call.1} parent=1 // loop_footer_branch
      %14 = sbr.rel target = $region3
    $region8: #{tpu_custom_call.1} parent=1 // loop_exit
      _
    %305 = vsyncpa [#allocation3], 1
    %s306 = scalar_lea.sflag [#allocation3], 1
    %307 = vsyncpa %s306, 1
    %308 = vsyncpa [#allocation4], 1
    %s309 = scalar_lea.sflag [#allocation4], 1
    %310 = vsyncpa %s309, 1

</llo_original>
